<compile_context>
chip_gen: v5e
topology: v5e:2x2
jax: 0.10.0
libtpu: 0.0.40
codegen_flags: <defaults>
</compile_context>

<pallas_src>
import functools

import jax
import jax.numpy as jnp
from jax.experimental import pallas as pl
from jax.experimental.pallas import tpu as pltpu

HIDDEN = 64
FUSED = 2 * HIDDEN        # actor+critic hidden lanes fused -> 128 (full lane width)
Z3_LANES = 128            # fused layer-3 output width (lane-dense for the MXU)
OUT_W = 2                 # packed narrow output lanes: [logp | value]


def _round_up(x, m):
    return (x + m - 1) // m * m


def _evaluate_kernel(state_ref, action_ref, half_inv_var_ref, const_ref,
                     w1_ref, b1_ref, w2_ref, b2_ref, w3_ref, b3_ref,
                     out_ref):
    """One batch tile: fused actor+critic MLP + MVN(diag) log_prob.

    Fused weight layout (prepared once in the wrapper):
      w1 (S,128)   = [aw1 | cw1]                  b1 = [ab1 | cb1]
      w2 (128,128) = blockdiag(aw2, cw2)          b2 = [ab2 | cb2]
      w3 (128,128) = blockdiag(aw3, cw3), 0-pad   b3 = [ab3 | cb3 | 0]
    so z3 lanes are [actor mean (A) | critic value | zeros].
    """
    wd = w1_ref.dtype
    A = action_ref.shape[-1]

    z = jnp.tanh(jnp.dot(state_ref[...], w1_ref[...],
                         preferred_element_type=jnp.float32) + b1_ref[...])
    z = jnp.tanh(jnp.dot(z.astype(wd), w2_ref[...],
                         preferred_element_type=jnp.float32) + b2_ref[...])
    z3 = jnp.dot(z.astype(wd), w3_ref[...],
                 preferred_element_type=jnp.float32) + b3_ref[...]     # (TB, 128)

    mean = z3[:, :A]                         # static lane slice: actor mean
    value = z3[:, A:A + 1]                   # critic value, (TB, 1)

    # MultivariateNormal(mean, diag(var)) log_prob, with the -0.5 factor
    # already folded into half_inv_var / const by the wrapper (f32 math).
    diff = action_ref[...] - mean            # action stays f32
    maha = jnp.sum(diff * diff * half_inv_var_ref[...], axis=-1, keepdims=True)
    logp = -(maha + const_ref[0, 0])         # const = 0.5*(logdet + k*log(2*pi))

    # Narrow packed output: two masked single-lane stores, hidden under compute.
    out_ref[:, 0:1] = logp
    out_ref[:, 1:2] = value


@functools.partial(jax.jit, static_argnames=("block_b", "use_bf16"))
def actor_critic_evaluate(state, action, action_var, actor_params, critic_params,
                          *, block_b=4096, use_bf16=True):
    """Returns (action_logprobs [B], state_values [B,1], dist_entropy [B])."""
    f32 = jnp.float32
    aw1, ab1, aw2, ab2, aw3, ab3 = actor_params
    cw1, cb1, cw2, cb2, cw3, cb3 = critic_params
    B, S = state.shape
    A = action.shape[-1]
    assert A >= 1, "action_dim must be >= 1"
    assert A + 1 <= Z3_LANES

    # ---- one-time fused parameter packing: 3 wide matmuls instead of 6 ----
    w1 = jnp.concatenate([aw1, cw1], axis=1).astype(f32)              # (S, 128)
    b1 = jnp.concatenate([ab1, cb1], axis=1).astype(f32)              # (1, 128)
    w2 = jnp.zeros((FUSED, FUSED), f32)
    w2 = w2.at[:HIDDEN, :HIDDEN].set(aw2).at[HIDDEN:, HIDDEN:].set(cw2)
    b2 = jnp.concatenate([ab2, cb2], axis=1).astype(f32)
    w3 = jnp.zeros((FUSED, Z3_LANES), f32)
    w3 = w3.at[:HIDDEN, :A].set(aw3).at[HIDDEN:, A:A + 1].set(cw3)    # exact zero pad
    b3 = jnp.zeros((1, Z3_LANES), f32)
    b3 = b3.at[:, :A].set(ab3).at[:, A:A + 1].set(cb3)

    # ---- distribution constants hoisted (exact math, -0.5 pre-folded) ----
    half_inv_var = (0.5 / action_var).reshape(1, A).astype(f32)       # (1, A) VMEM
    logdet = jnp.sum(jnp.log(action_var))
    log2pi = jnp.log(2.0 * jnp.pi)
    const = (0.5 * (logdet + A * log2pi)).reshape(1, 1).astype(f32)   # SMEM scalar

    # ---- batch tiling: big tiles, >=2 grid steps on large batches (v7x) ----
    b8 = _round_up(B, 8)
    if b8 > 2048:
        tb = min(block_b, _round_up(-(-b8 // 2), 8))   # split so grid >= 2 steps
    else:
        tb = min(block_b, b8)
    tb = _round_up(tb, 8)
    bp = _round_up(B, tb)

    pad = bp - B
    if pad:
        state_in = jnp.pad(state, ((0, pad), (0, 0)))
        action_in = jnp.pad(action, ((0, pad), (0, 0)))
    else:
        state_in, action_in = state, action

    # bf16 streaming of state + fused weights (halves dominant HBM traffic on
    # all generations; MXU accumulates f32).  Action / biases / inv_var /
    # const / all log-prob math stay f32 for PPO-ratio precision.
    wdt = jnp.bfloat16 if use_bf16 else f32
    state_in = state_in.astype(wdt)
    action_in = action_in.astype(f32)
    w1c, w2c, w3c = w1.astype(wdt), w2.astype(wdt), w3.astype(wdt)

    row_spec = lambda shape: pl.BlockSpec(shape, lambda i: (i, 0))   # pipelined
    res_spec = lambda shape: pl.BlockSpec(shape, lambda i: (0, 0))   # resident

    out = pl.pallas_call(
        _evaluate_kernel,
        out_shape=jax.ShapeDtypeStruct((bp, OUT_W), f32),
        grid=(bp // tb,),
        in_specs=[
            row_spec((tb, S)),               # state tile (pipelined)
            row_spec((tb, A)),               # action tile (pipelined, narrow)
            res_spec((1, A)),                # 0.5 / action_var
            pl.BlockSpec(memory_space=pltpu.MemorySpace.SMEM),   # const scalar
            res_spec((S, FUSED)),            # w1
            res_spec((1, FUSED)),            # b1
            res_spec((FUSED, FUSED)),        # w2
            res_spec((1, FUSED)),            # b2
            res_spec((FUSED, Z3_LANES)),     # w3
            res_spec((1, Z3_LANES)),         # b3
        ],
        out_specs=row_spec((tb, OUT_W)),
        compiler_params=pltpu.CompilerParams(
            dimension_semantics=("parallel",)),  # batch tiles shard over v7x TCs
        # Footprint ~1 MiB at tb=4096 (bf16 state, narrow action/output,
        # resident weights) -> well inside every generation's scoped VMEM.
    )(state_in, action_in, half_inv_var, const, w1c, b1, w2c, b2, w3c, b3)

    logp = out[:B, 0]
    value = out[:B, 1:2]
    ent = jnp.full((B,), 0.5 * A * (1.0 + log2pi) + 0.5 * logdet, f32)
    return logp, value, ent


# ---------------------------------------------------------------------------
# Parameter init (PyTorch nn.Linear default) and pure-JAX reference
# ---------------------------------------------------------------------------
def _init_linear(key, fan_in, fan_out):
    kw, kb = jax.random.split(key)
    bound = 1.0 / jnp.sqrt(fan_in)
    w = jax.random.uniform(kw, (fan_in, fan_out), jnp.float32, -bound, bound)
    b = jax.random.uniform(kb, (1, fan_out), jnp.float32, -bound, bound)
    return w, b


def make_params(key, state_dim, action_dim):
    keys = jax.random.split(key, 6)
    aw1, ab1 = _init_linear(keys[0], state_dim, HIDDEN)
    aw2, ab2 = _init_linear(keys[1], HIDDEN, HIDDEN)
    aw3, ab3 = _init_linear(keys[2], HIDDEN, action_dim)
    cw1, cb1 = _init_linear(keys[3], state_dim, HIDDEN)
    cw2, cb2 = _init_linear(keys[4], HIDDEN, HIDDEN)
    cw3, cb3 = _init_linear(keys[5], HIDDEN, 1)
    return (aw1, ab1, aw2, ab2, aw3, ab3), (cw1, cb1, cw2, cb2, cw3, cb3)


def _reference(state, action, action_var, actor_params, critic_params):
    aw1, ab1, aw2, ab2, aw3, ab3 = actor_params
    cw1, cb1, cw2, cb2, cw3, cb3 = critic_params
    h = jnp.tanh(state @ aw1 + ab1)
    h = jnp.tanh(h @ aw2 + ab2)
    mean = h @ aw3 + ab3
    g = jnp.tanh(state @ cw1 + cb1)
    g = jnp.tanh(g @ cw2 + cb2)
    value = g @ cw3 + cb3
    k = action.shape[-1]
    log2pi = jnp.log(2.0 * jnp.pi)
    logdet = jnp.sum(jnp.log(action_var))
    maha = jnp.sum((action - mean) ** 2 / action_var, axis=-1)
    logp = -0.5 * (maha + logdet + k * log2pi)
    ent = jnp.full((state.shape[0],), 0.5 * k * (1.0 + log2pi) + 0.5 * logdet)
    return logp, value, ent


if __name__ == "__main__":
    STATE_DIM, ACTION_DIM = 32, 8
    ACTION_STD_INIT = 0.6

    key = jax.random.PRNGKey(0)
    k_s, k_a, k_p, k_s2, k_a2 = jax.random.split(key, 5)

    actor_params, critic_params = make_params(k_p, STATE_DIM, ACTION_DIM)
    action_var = jnp.full((ACTION_DIM,), ACTION_STD_INIT * ACTION_STD_INIT, jnp.float32)

    # --- small batch, f32 exact path: single grid step ---
    B1 = 8
    state = jax.random.normal(k_s, (B1, STATE_DIM), jnp.float32)
    action = jax.random.normal(k_a, (B1, ACTION_DIM), jnp.float32)
    logp, value, ent = actor_critic_evaluate(
        state, action, action_var, actor_params, critic_params, use_bf16=False)
    jax.block_until_ready((logp, value, ent))
    r_logp, r_value, r_ent = _reference(
        state, action, action_var, actor_params, critic_params)
    assert logp.shape == (B1,) and value.shape == (B1, 1) and ent.shape == (B1,)
    assert jnp.allclose(logp, r_logp, atol=1e-3, rtol=1e-4), "logprob mismatch"
    assert jnp.allclose(value, r_value, atol=1e-3, rtol=1e-4), "value mismatch"
    assert jnp.allclose(ent, r_ent, atol=1e-4), "entropy mismatch"

    # --- larger ragged batch, f32: exercises padding + multi-step grid ---
    B2 = 100
    state2 = jax.random.normal(k_s2, (B2, STATE_DIM), jnp.float32)
    action2 = jax.random.normal(k_a2, (B2, ACTION_DIM), jnp.float32)
    logp2, value2, ent2 = actor_critic_evaluate(
        state2, action2, action_var, actor_params, critic_params,
        block_b=32, use_bf16=False)
    jax.block_until_ready((logp2, value2, ent2))
    r_logp2, r_value2, _ = _reference(
        state2, action2, action_var, actor_params, critic_params)
    assert logp2.shape == (B2,) and value2.shape == (B2, 1)
    assert jnp.allclose(logp2, r_logp2, atol=1e-3, rtol=1e-4), "logprob mismatch (tiled)"
    assert jnp.allclose(value2, r_value2, atol=1e-3, rtol=1e-4), "value mismatch (tiled)"

    # --- default path: bf16 streaming of state/weights, f32 action/logp math ---
    logp3, value3, ent3 = actor_critic_evaluate(
        state2, action2, action_var, actor_params, critic_params)
    jax.block_until_ready((logp3, value3, ent3))
    assert bool(jnp.all(jnp.isfinite(logp3))) and bool(jnp.all(jnp.isfinite(value3)))
    assert jnp.allclose(logp3, r_logp2, atol=1.0, rtol=0.05), "logprob mismatch (bf16)"
    assert jnp.allclose(value3, r_value2, atol=0.1), "value mismatch (bf16)"

    print("KERNEL_OK")
</pallas_src>

<mosaic_0001>
module attributes {stable_mosaic.version = 11 : i64} {
  func.func @_evaluate_kernel(%arg0: i32, %arg1: memref<8x32xf32, #tpu.memory_space<vmem>>, %arg2: memref<8x8xf32, #tpu.memory_space<vmem>>, %arg3: memref<1x8xf32, #tpu.memory_space<vmem>>, %arg4: memref<1x1xf32, #tpu.memory_space<smem>>, %arg5: memref<32x128xf32, #tpu.memory_space<vmem>>, %arg6: memref<1x128xf32, #tpu.memory_space<vmem>>, %arg7: memref<128x128xf32, #tpu.memory_space<vmem>>, %arg8: memref<1x128xf32, #tpu.memory_space<vmem>>, %arg9: memref<128x128xf32, #tpu.memory_space<vmem>>, %arg10: memref<1x128xf32, #tpu.memory_space<vmem>>, %arg11: memref<8x2xf32, #tpu.memory_space<vmem>>) attributes {dimension_semantics = [#tpu.dimension_semantics<parallel>], iteration_bounds = array<i64: 1>, scalar_prefetch = 0 : i64, scratch_operands = 0 : i64, tpu.core_type = #tpu.core_type<tc>, window_params = [{transform_indices = @transform_0, window_bounds = array<i64: 8, 32>}, {transform_indices = @transform_1, window_bounds = array<i64: 8, 8>}, {pipeline_mode = #tpu.pipeline_mode<synchronous>, transform_indices = @transform_2, window_bounds = array<i64: 1, 8>}, {transform_indices = @transform_3, window_bounds = array<i64: 1, 1>}, {pipeline_mode = #tpu.pipeline_mode<synchronous>, transform_indices = @transform_4, window_bounds = array<i64: 32, 128>}, {pipeline_mode = #tpu.pipeline_mode<synchronous>, transform_indices = @transform_5, window_bounds = array<i64: 1, 128>}, {pipeline_mode = #tpu.pipeline_mode<synchronous>, transform_indices = @transform_6, window_bounds = array<i64: 128, 128>}, {pipeline_mode = #tpu.pipeline_mode<synchronous>, transform_indices = @transform_7, window_bounds = array<i64: 1, 128>}, {pipeline_mode = #tpu.pipeline_mode<synchronous>, transform_indices = @transform_8, window_bounds = array<i64: 128, 128>}, {pipeline_mode = #tpu.pipeline_mode<synchronous>, transform_indices = @transform_9, window_bounds = array<i64: 1, 128>}, {transform_indices = @transform_10, window_bounds = array<i64: 8, 2>}]} {
    %c0 = arith.constant 0 : index
    %c0_0 = arith.constant 0 : index
    %0 = vector.load %arg1[%c0, %c0_0] : memref<8x32xf32, #tpu.memory_space<vmem>>, vector<8x32xf32>
    %c0_1 = arith.constant 0 : index
    %c0_2 = arith.constant 0 : index
    %1 = vector.load %arg5[%c0_1, %c0_2] : memref<32x128xf32, #tpu.memory_space<vmem>>, vector<32x128xf32>
    %cst = arith.constant dense<0.000000e+00> : vector<8x128xf32>
    %2 = tpu.matmul %0, %1, %cst {dimension_numbers = #tpu.dot_dimension_numbers<[1], [0], [0], [1], [0, 0, 1, 1], [], []>} : vector<8x32xf32>, vector<32x128xf32>, vector<8x128xf32> -> vector<8x128xf32>
    %c0_3 = arith.constant 0 : index
    %c0_4 = arith.constant 0 : index
    %3 = vector.load %arg6[%c0_3, %c0_4] : memref<1x128xf32, #tpu.memory_space<vmem>>, vector<1x128xf32>
    %4 = vector.broadcast %3 : vector<1x128xf32> to vector<8x128xf32>
    %5 = arith.addf %2, %4 : vector<8x128xf32>
    %6 = math.tanh %5 : vector<8x128xf32>
    %c0_5 = arith.constant 0 : index
    %c0_6 = arith.constant 0 : index
    %7 = vector.load %arg7[%c0_5, %c0_6] : memref<128x128xf32, #tpu.memory_space<vmem>>, vector<128x128xf32>
    %cst_7 = arith.constant dense<0.000000e+00> : vector<8x128xf32>
    %8 = tpu.matmul %6, %7, %cst_7 {dimension_numbers = #tpu.dot_dimension_numbers<[1], [0], [0], [1], [0, 0, 1, 1], [], []>} : vector<8x128xf32>, vector<128x128xf32>, vector<8x128xf32> -> vector<8x128xf32>
    %c0_8 = arith.constant 0 : index
    %c0_9 = arith.constant 0 : index
    %9 = vector.load %arg8[%c0_8, %c0_9] : memref<1x128xf32, #tpu.memory_space<vmem>>, vector<1x128xf32>
    %10 = vector.broadcast %9 : vector<1x128xf32> to vector<8x128xf32>
    %11 = arith.addf %8, %10 : vector<8x128xf32>
    %12 = math.tanh %11 : vector<8x128xf32>
    %c0_10 = arith.constant 0 : index
    %c0_11 = arith.constant 0 : index
    %13 = vector.load %arg9[%c0_10, %c0_11] : memref<128x128xf32, #tpu.memory_space<vmem>>, vector<128x128xf32>
    %cst_12 = arith.constant dense<0.000000e+00> : vector<8x128xf32>
    %14 = tpu.matmul %12, %13, %cst_12 {dimension_numbers = #tpu.dot_dimension_numbers<[1], [0], [0], [1], [0, 0, 1, 1], [], []>} : vector<8x128xf32>, vector<128x128xf32>, vector<8x128xf32> -> vector<8x128xf32>
    %c0_13 = arith.constant 0 : index
    %c0_14 = arith.constant 0 : index
    %15 = vector.load %arg10[%c0_13, %c0_14] : memref<1x128xf32, #tpu.memory_space<vmem>>, vector<1x128xf32>
    %16 = vector.broadcast %15 : vector<1x128xf32> to vector<8x128xf32>
    %17 = arith.addf %14, %16 : vector<8x128xf32>
    %18 = vector.extract_strided_slice %17 {offsets = [0, 0], sizes = [8, 8], strides = [1, 1]} : vector<8x128xf32> to vector<8x8xf32>
    %19 = vector.extract_strided_slice %17 {offsets = [0, 8], sizes = [8, 1], strides = [1, 1]} : vector<8x128xf32> to vector<8x1xf32>
    %c0_15 = arith.constant 0 : index
    %c0_16 = arith.constant 0 : index
    %20 = vector.load %arg2[%c0_15, %c0_16] : memref<8x8xf32, #tpu.memory_space<vmem>>, vector<8x8xf32>
    %21 = arith.subf %20, %18 : vector<8x8xf32>
    %22 = arith.mulf %21, %21 : vector<8x8xf32>
    %c0_17 = arith.constant 0 : index
    %c0_18 = arith.constant 0 : index
    %23 = vector.load %arg3[%c0_17, %c0_18] : memref<1x8xf32, #tpu.memory_space<vmem>>, vector<1x8xf32>
    %24 = vector.broadcast %23 : vector<1x8xf32> to vector<8x8xf32>
    %25 = arith.mulf %22, %24 : vector<8x8xf32>
    %cst_19 = arith.constant dense<0.000000e+00> : vector<8xf32>
    %26 = vector.multi_reduction <add>, %25, %cst_19 [1] : vector<8x8xf32> to vector<8xf32>
    %27 = vector.shape_cast %26 : vector<8xf32> to vector<8x1xf32>
    %c0_20 = arith.constant 0 : index
    %c0_21 = arith.constant 0 : index
    %28 = memref.load %arg4[%c0_20, %c0_21] : memref<1x1xf32, #tpu.memory_space<smem>>
    %29 = vector.broadcast %28 : f32 to vector<8x1xf32>
    %30 = arith.addf %27, %29 : vector<8x1xf32>
    %cst_22 = arith.constant 0.000000e+00 : f32
    %31 = vector.broadcast %cst_22 : f32 to vector<8x1xf32>
    %32 = arith.subf %31, %30 : vector<8x1xf32>
    %c0_23 = arith.constant 0 : index
    %c0_24 = arith.constant 0 : index
    %33 = vector.load %arg11[%c0_23, %c0_24] : memref<8x2xf32, #tpu.memory_space<vmem>>, vector<8x1xf32>
    tpu.vector_store %arg11[%c0_23, %c0_24], %32 {strides = array<i32>} : memref<8x2xf32, #tpu.memory_space<vmem>>, vector<8x1xf32>,
    %c0_25 = arith.constant 0 : index
    %c1 = arith.constant 1 : index
    %34 = vector.load %arg11[%c0_25, %c1] : memref<8x2xf32, #tpu.memory_space<vmem>>, vector<8x1xf32>
    tpu.vector_store %arg11[%c0_25, %c1], %19 {strides = array<i32>} : memref<8x2xf32, #tpu.memory_space<vmem>>, vector<8x1xf32>,
    return
  }
  func.func @transform_0(%arg0: i32) -> (i32, i32) {
    %c0_i32 = arith.constant 0 : i32
    %c0_i32_0 = arith.constant 0 : i32
    return %arg0, %c0_i32 : i32, i32
  }
  func.func @transform_1(%arg0: i32) -> (i32, i32) {
    %c0_i32 = arith.constant 0 : i32
    %c0_i32_0 = arith.constant 0 : i32
    return %arg0, %c0_i32 : i32, i32
  }
  func.func @transform_2(%arg0: i32) -> (i32, i32) {
    %c0_i32 = arith.constant 0 : i32
    %c0_i32_0 = arith.constant 0 : i32
    %c0_i32_1 = arith.constant 0 : i32
    return %c0_i32, %c0_i32_0 : i32, i32
  }
  func.func @transform_3(%arg0: i32) -> (i32, i32) {
    %c0_i32 = arith.constant 0 : i32
    %c0_i32_0 = arith.constant 0 : i32
    %c0_i32_1 = arith.constant 0 : i32
    return %c0_i32, %c0_i32_0 : i32, i32
  }
  func.func @transform_4(%arg0: i32) -> (i32, i32) {
    %c0_i32 = arith.constant 0 : i32
    %c0_i32_0 = arith.constant 0 : i32
    %c0_i32_1 = arith.constant 0 : i32
    return %c0_i32, %c0_i32_0 : i32, i32
  }
  func.func @transform_5(%arg0: i32) -> (i32, i32) {
    %c0_i32 = arith.constant 0 : i32
    %c0_i32_0 = arith.constant 0 : i32
    %c0_i32_1 = arith.constant 0 : i32
    return %c0_i32, %c0_i32_0 : i32, i32
  }
  func.func @transform_6(%arg0: i32) -> (i32, i32) {
    %c0_i32 = arith.constant 0 : i32
    %c0_i32_0 = arith.constant 0 : i32
    %c0_i32_1 = arith.constant 0 : i32
    return %c0_i32, %c0_i32_0 : i32, i32
  }
  func.func @transform_7(%arg0: i32) -> (i32, i32) {
    %c0_i32 = arith.constant 0 : i32
    %c0_i32_0 = arith.constant 0 : i32
    %c0_i32_1 = arith.constant 0 : i32
    return %c0_i32, %c0_i32_0 : i32, i32
  }
  func.func @transform_8(%arg0: i32) -> (i32, i32) {
    %c0_i32 = arith.constant 0 : i32
    %c0_i32_0 = arith.constant 0 : i32
    %c0_i32_1 = arith.constant 0 : i32
    return %c0_i32, %c0_i32_0 : i32, i32
  }
  func.func @transform_9(%arg0: i32) -> (i32, i32) {
    %c0_i32 = arith.constant 0 : i32
    %c0_i32_0 = arith.constant 0 : i32
    %c0_i32_1 = arith.constant 0 : i32
    return %c0_i32, %c0_i32_0 : i32, i32
  }
  func.func @transform_10(%arg0: i32) -> (i32, i32) {
    %c0_i32 = arith.constant 0 : i32
    %c0_i32_0 = arith.constant 0 : i32
    return %arg0, %c0_i32 : i32, i32
  }
}

</mosaic_0001>

<llo_original>
// kernel: actor_critic_evaluate.1
$region0: #{actor_critic_evaluate.1}
  #allocation0 [shape = 'u32[]', space=smem, size = 0x4, offset = 0x4, fixed_abs, tag = 'smem constant byte address 0x4 - core index']
  #allocation1 [shape = 'u32[72,128]{1,0:T(1,128)}', space=vmem, size = 0x9000, scoped, tag = 'internal scratch']
  #allocation2 [shape = 'f32[1,1]{1,0:T(1,128)S(6)}', space=smem, size = 0x200, scoped, tag = 'scoped memory for actor_critic_evaluate.1']
  %s0 = inlined_call_operand.vmem [shape: f32[8,32], index: 0, kind: input, shape index: {}]
  %s1 = inlined_call_operand.vmem [shape: f32[8,8], index: 1, kind: input, shape index: {}]
  %s2 = inlined_call_operand.vmem [shape: f32[1,8], index: 2, kind: input, shape index: {}]
  %s3 = inlined_call_operand.<no memory space> [shape: f32[1,1], index: 3, kind: input, shape index: {}]
  %s4 = inlined_call_operand.vmem [shape: f32[32,128], index: 4, kind: input, shape index: {}]
  %s5 = inlined_call_operand.vmem [shape: f32[1,128], index: 5, kind: input, shape index: {}]
  %s6 = inlined_call_operand.vmem [shape: f32[128,128], index: 6, kind: input, shape index: {}]
  %s7 = inlined_call_operand.vmem [shape: f32[1,128], index: 7, kind: input, shape index: {}]
  %s8 = inlined_call_operand.vmem [shape: f32[128,128], index: 8, kind: input, shape index: {}]
  %s9 = inlined_call_operand.vmem [shape: f32[1,128], index: 9, kind: input, shape index: {}]
  %s10 = inlined_call_operand.vmem [shape: f32[8,2], index: 10, kind: output, shape index: {}]
  %s11 = sld [smem:[#allocation0]]
  $region50: #{actor_critic_evaluate.1} parent=0
    _
  %s13 = ssub.s32 1, %s11
  %s14 = scalar_select 0, %s13, %s11
  %15 = sst [smem:[#allocation2]] %s3
  // Predicated region
  $region2: #{actor_critic_evaluate.1} parent=0 // pred_check
    _
  $region3: #{actor_critic_evaluate.1} parent=0 // pred_check_branch
    %17 = sbr.rel (0) target = $region5
  $region4: #{actor_critic_evaluate.1} parent=0 // pred_region
    _
  $region5: #{actor_critic_evaluate.1} parent=0 // pred_fallthru
    _
  // Predicated region
  $region6: #{actor_critic_evaluate.1} parent=0 // pred_check
    _
  $region7: #{actor_critic_evaluate.1} parent=0 // pred_check_branch
    %19 = sbr.rel (0) target = $region9
  $region8: #{actor_critic_evaluate.1} parent=0 // pred_region
    _
  $region9: #{actor_critic_evaluate.1} parent=0 // pred_fallthru
    _
  // Predicated region
  $region10: #{actor_critic_evaluate.1} parent=0 // pred_check
    _
  $region11: #{actor_critic_evaluate.1} parent=0 // pred_check_branch
    %21 = sbr.rel (0) target = $region13
  $region12: #{actor_critic_evaluate.1} parent=0 // pred_region
    _
  $region13: #{actor_critic_evaluate.1} parent=0 // pred_fallthru
    _
  // Predicated region
  $region14: #{actor_critic_evaluate.1} parent=0 // pred_check
    _
  $region15: #{actor_critic_evaluate.1} parent=0 // pred_check_branch
    %23 = sbr.rel (0) target = $region17
  $region16: #{actor_critic_evaluate.1} parent=0 // pred_region
    _
  $region17: #{actor_critic_evaluate.1} parent=0 // pred_fallthru
    _
  // Predicated region
  $region18: #{actor_critic_evaluate.1} parent=0 // pred_check
    _
  $region19: #{actor_critic_evaluate.1} parent=0 // pred_check_branch
    %25 = sbr.rel (0) target = $region21
  $region20: #{actor_critic_evaluate.1} parent=0 // pred_region
    _
  $region21: #{actor_critic_evaluate.1} parent=0 // pred_fallthru
    _
  // Predicated region
  $region22: #{actor_critic_evaluate.1} parent=0 // pred_check
    _
  $region23: #{actor_critic_evaluate.1} parent=0 // pred_check_branch
    %27 = sbr.rel (0) target = $region25
  $region24: #{actor_critic_evaluate.1} parent=0 // pred_region
    _
  $region25: #{actor_critic_evaluate.1} parent=0 // pred_fallthru
    _
  // Predicated region
  $region26: #{actor_critic_evaluate.1} parent=0 // pred_check
    _
  $region27: #{actor_critic_evaluate.1} parent=0 // pred_check_branch
    %29 = sbr.rel (0) target = $region29
  $region28: #{actor_critic_evaluate.1} parent=0 // pred_region
    _
  $region29: #{actor_critic_evaluate.1} parent=0 // pred_fallthru
    _
  // Predicated region
  $region30: #{actor_critic_evaluate.1} parent=0 // pred_check
    _
  $region31: #{actor_critic_evaluate.1} parent=0 // pred_check_branch
    %31 = sbr.rel (0) target = $region33
  $region32: #{actor_critic_evaluate.1} parent=0 // pred_region
    _
  $region33: #{actor_critic_evaluate.1} parent=0 // pred_fallthru
    _
  // Predicated region
  $region34: #{actor_critic_evaluate.1} parent=0 // pred_check
    _
  $region35: #{actor_critic_evaluate.1} parent=0 // pred_check_branch
    %33 = sbr.rel (0) target = $region37
  $region36: #{actor_critic_evaluate.1} parent=0 // pred_region
    _
  $region37: #{actor_critic_evaluate.1} parent=0 // pred_fallthru
    _
  // Predicated region
  $region38: #{actor_critic_evaluate.1} parent=0 // pred_check
    _
  $region39: #{actor_critic_evaluate.1} parent=0 // pred_check_branch
    %35 = sbr.rel (0) target = $region41
  $region40: #{actor_critic_evaluate.1} parent=0 // pred_region
    _
  $region41: #{actor_critic_evaluate.1} parent=0 // pred_fallthru
    _
  %v36 = vld [vmem:[%s0] sm:$0xff]
  %v37 = vld [vmem:[%s4] sm:$0xff]
  %v38 = vld [vmem:[%s4 + $0x8] sm:$0xff]
  %v39 = vld [vmem:[%s4 + $0x10] sm:$0xff]
  %v40 = vld [vmem:[%s4 + $0x18] sm:$0xff]
  %v41 = vld [vmem:[%s5] sm:$0x1]
  %v43 = vperm.slane %v41, 0
  %vm45 = vcmask 261120
  %v47 = vsel %vm45, %v36, 0
  %49 = vmatpush.msra.mxu0 0.0
  %50 = vmatpush.msra.mxu0 0.0
  %51 = vmatpush.msra.mxu0 0.0
  %52 = vmatpush.msra.mxu0 0.0
  %53 = vmatpush.msra.mxu0 0.0
  %54 = vmatpush.msra.mxu0 0.0
  %55 = vmatpush.msra.mxu0 0.0
  %56 = vmatpush.msra.mxu0 0.0
  %57 = vmatpush.msra.mxu0 0.0
  %58 = vmatpush.msra.mxu0 0.0
  %59 = vmatpush.msra.mxu0 0.0
  %60 = vmatpush.msra.mxu0 0.0
  %61 = vmatpush.msra.mxu0 %v40
  %62 = vmatpush.msra.mxu0 %v39
  %63 = vmatpush.msra.mxu0 %v38
  %64 = vmatpush.msra.mxu0 %v37
  %65 = vmatmul.f32.gmra.mxu0 %v47
  %v66 = vpop.f32.mrf.mxu0
  %v67 = vadd.f32 %v43, %v66
  %68 = vdwg.mxu0
  %v69 = vtanh.pop %v67
  %v70 = vld [vmem:[%s6] sm:$0xff]
  %v71 = vld [vmem:[%s6 + $0x8] sm:$0xff]
  %v72 = vld [vmem:[%s6 + $0x10] sm:$0xff]
  %v73 = vld [vmem:[%s6 + $0x18] sm:$0xff]
  %v74 = vld [vmem:[%s6 + $0x20] sm:$0xff]
  %v75 = vld [vmem:[%s6 + $0x28] sm:$0xff]
  %v76 = vld [vmem:[%s6 + $0x30] sm:$0xff]
  %v77 = vld [vmem:[%s6 + $0x38] sm:$0xff]
  %v78 = vld [vmem:[%s6 + $0x40] sm:$0xff]
  %v79 = vld [vmem:[%s6 + $0x48] sm:$0xff]
  %v80 = vld [vmem:[%s6 + $0x50] sm:$0xff]
  %v81 = vld [vmem:[%s6 + $0x58] sm:$0xff]
  %v82 = vld [vmem:[%s6 + $0x60] sm:$0xff]
  %v83 = vld [vmem:[%s6 + $0x68] sm:$0xff]
  %v84 = vld [vmem:[%s6 + $0x70] sm:$0xff]
  %v85 = vld [vmem:[%s6 + $0x78] sm:$0xff]
  %v86 = vld [vmem:[%s7] sm:$0x1]
  %v88 = vperm.slane %v86, 0
  %90 = vmatpush.msra.mxu0 %v85
  %91 = vmatpush.msra.mxu0 %v84
  %92 = vmatpush.msra.mxu0 %v83
  %93 = vmatpush.msra.mxu0 %v82
  %94 = vmatpush.msra.mxu0 %v81
  %95 = vmatpush.msra.mxu0 %v80
  %96 = vmatpush.msra.mxu0 %v79
  %97 = vmatpush.msra.mxu0 %v78
  %98 = vmatpush.msra.mxu0 %v77
  %99 = vmatpush.msra.mxu0 %v76
  %100 = vmatpush.msra.mxu0 %v75
  %101 = vmatpush.msra.mxu0 %v74
  %102 = vmatpush.msra.mxu0 %v73
  %103 = vmatpush.msra.mxu0 %v72
  %104 = vmatpush.msra.mxu0 %v71
  %105 = vmatpush.msra.mxu0 %v70
  %106 = vmatmul.f32.gmra.mxu0 %v69
  %v107 = vpop.f32.mrf.mxu0
  %v108 = vadd.f32 %v88, %v107
  %109 = vdwg.mxu0
  %v110 = vtanh.pop %v108
  %v111 = vld [vmem:[%s8] sm:$0xff]
  %v112 = vld [vmem:[%s8 + $0x8] sm:$0xff]
  %v113 = vld [vmem:[%s8 + $0x10] sm:$0xff]
  %v114 = vld [vmem:[%s8 + $0x18] sm:$0xff]
  %v115 = vld [vmem:[%s8 + $0x20] sm:$0xff]
  %v116 = vld [vmem:[%s8 + $0x28] sm:$0xff]
  %v117 = vld [vmem:[%s8 + $0x30] sm:$0xff]
  %v118 = vld [vmem:[%s8 + $0x38] sm:$0xff]
  %v119 = vld [vmem:[%s8 + $0x40] sm:$0xff]
  %v120 = vld [vmem:[%s8 + $0x48] sm:$0xff]
  %v121 = vld [vmem:[%s8 + $0x50] sm:$0xff]
  %v122 = vld [vmem:[%s8 + $0x58] sm:$0xff]
  %v123 = vld [vmem:[%s8 + $0x60] sm:$0xff]
  %v124 = vld [vmem:[%s8 + $0x68] sm:$0xff]
  %v125 = vld [vmem:[%s8 + $0x70] sm:$0xff]
  %v126 = vld [vmem:[%s8 + $0x78] sm:$0xff]
  %v127 = vld [vmem:[%s9] sm:$0x1]
  %v129 = vperm.slane %v127, 0
  %131 = vmatpush.msra.mxu0 %v126
  %132 = vmatpush.msra.mxu0 %v125
  %133 = vmatpush.msra.mxu0 %v124
  %134 = vmatpush.msra.mxu0 %v123
  %135 = vmatpush.msra.mxu0 %v122
  %136 = vmatpush.msra.mxu0 %v121
  %137 = vmatpush.msra.mxu0 %v120
  %138 = vmatpush.msra.mxu0 %v119
  %139 = vmatpush.msra.mxu0 %v118
  %140 = vmatpush.msra.mxu0 %v117
  %141 = vmatpush.msra.mxu0 %v116
  %142 = vmatpush.msra.mxu0 %v115
  %143 = vmatpush.msra.mxu0 %v114
  %144 = vmatpush.msra.mxu0 %v113
  %145 = vmatpush.msra.mxu0 %v112
  %146 = vmatpush.msra.mxu0 %v111
  %147 = vmatmul.f32.gmra.mxu0 %v110
  %v148 = vpop.f32.mrf.mxu0
  %v149 = vadd.f32 %v129, %v148
  %150 = vdwg.mxu0
  %v151 = vld [vmem:[%s1] sm:$0xff]
  %v152 = vsub.f32 %v151, %v149
  %v153 = vmul.f32 %v152, %v152
  %v154 = vld [vmem:[%s2] sm:$0x1]
  %v156 = vperm.slane %v154, 0
  %v158 = vmul.f32 %v153, %v156
  %vm159 = vcmask 64512
  %v160 = vsel %vm159, %v158, 0.0
  %161 = vadd.xlane.f32.xlu0 %v160
  %v162 = vpop.xlane.xlu0 %161
  %s163 = sld [smem:[#allocation2]]
  %v164 = vstv %s163
  %v165 = vadd.f32 %v162, %v164
  %v166 = vsub.f32 0.0, %v165
  %vm167 = vcmask 7168
  %168 = vst.msk [vmem:[%s10] sm:$0xff] %vm167, %v166
  %170 = vrot.lane.b32.xlu0 %v149, 121
  %v171 = vpop.permute.xlu0 %170
  %vm173 = vcmask 15368
  %174 = vst.msk [vmem:[%s10] sm:$0xff] %vm173, %v171
  // Predicated region
  $region42: #{actor_critic_evaluate.1} parent=0 // pred_check
    _
  $region43: #{actor_critic_evaluate.1} parent=0 // pred_check_branch
    %176 = sbr.rel (0) target = $region45
  $region44: #{actor_critic_evaluate.1} parent=0 // pred_region
    _
  $region45: #{actor_critic_evaluate.1} parent=0 // pred_fallthru
    _
  // Predicated region
  $region46: #{actor_critic_evaluate.1} parent=0 // pred_check
    _
  $region47: #{actor_critic_evaluate.1} parent=0 // pred_check_branch
    %178 = sbr.rel (0) target = $region49
  $region48: #{actor_critic_evaluate.1} parent=0 // pred_region
    _
  $region49: #{actor_critic_evaluate.1} parent=0 // pred_fallthru
    _

</llo_original>
